<compile_context>
chip_gen: v7x
topology: tpu7x:2x2x1
jax: 0.10.0
libtpu: 0.0.40
codegen_flags: <defaults>
</compile_context>

<pallas_src>
import functools

import jax
import jax.numpy as jnp
from jax import lax
from jax.experimental import pallas as pl
from jax.experimental.pallas import tpu as pltpu


# ---------------- static helpers (wrapper side) -------------------------------

def _round_up(x, m):
    return ((x + m - 1) // m) * m


def _l_chunk(L, max_chunk=128):
    """Largest sublane-aligned chunk of L for concat's f32 temporaries."""
    if L <= max_chunk:
        return L
    for c in (128, 64, 32, 16, 8):
        if L % c == 0:
            return c
    return L  # ragged L: fall back to a single full chunk


def _vmem_limit_bytes():
    """Scoped-VMEM budget derived from the physical capacity of this chip.

    v5e/v6e (128 MiB physical) -> 96 MiB, v7x (64 MiB) -> 48 MiB.  The scoped
    default (16/32 MiB) is far too small for large enc batch tiles.
    """
    try:
        phys = pltpu.get_tpu_info().vmem_capacity_bytes
    except Exception:  # not queryable: assume the smallest (v7x-class) chip
        phys = 64 * 1024 * 1024
    return min(int(phys * 3 // 4), 100 * 1024 * 1024)


def _pick_batch_tile(B, L, H, score_name, enc_item, lc, vmem_limit):
    """Largest batch tile that fits the VMEM budget, leaving >= 2 grid steps
    when possible so both v7x TensorCores get work."""
    f32 = 4
    align = 8 if enc_item >= 4 else 16          # sublane packing (f32 / bf16)
    n_mats = {'dot': 2, 'general': 3, 'concat': 4}[score_name]
    weight_bytes = 2 * (n_mats * H * H + 4 * H) * f32   # worst case (double-buffered)
    # Live bytes per batch row in one grid step: enc block (double-buffered) +
    # its in-kernel f32 upcast + one elementwise temp, h/out blocks, score/exp,
    # plus concat's per-chunk (lc) f32 temporaries.
    per_row = 2 * L * H * enc_item + 2 * L * H * f32 + 4 * H * f32 + 8 * L
    if score_name == 'concat':
        per_row += 2 * lc * H * f32
    budget = int(vmem_limit * 0.8) - weight_bytes - (4 << 20)
    tb = max(align, budget // max(per_row, 1))
    tb = min(tb, 1024, max(align, _round_up(-(-B // 2), align)))
    if tb >= B:
        return B                                 # one full-array block (always layout-legal)
    return max(align, (tb // align) * align)


# ---------------- kernel helpers (traced inside the Pallas kernel) ------------

def _attend(score, enc):
    """softmax over L + context.  score: (TB, L); enc: (TB, L, H), all f32.

    The context reduction stays on the VPU/XLU (mul + sublane reduce) instead
    of a q=1 batched einsum: M=1 MXU pushes waste the systolic rows and force
    attn/enc relayouts.
    """
    m = jnp.max(score, axis=-1, keepdims=True)
    e = jnp.exp(score - m)
    denom = jnp.sum(e, axis=-1, keepdims=True)
    attn = e * pl.reciprocal(denom, approx=True)        # EUP slot, ~free
    return jnp.sum(attn[:, :, None] * enc, axis=1)      # (TB, H)


def _output(context, h, wc1, wc2, wcb):
    # Wc(cat([context, h], -1)).tanh() == tanh(context @ Wc1 + h @ Wc2 + b)
    pre = (jnp.dot(context, wc1, preferred_element_type=jnp.float32)
           + jnp.dot(h, wc2, preferred_element_type=jnp.float32)
           + wcb)
    return jnp.tanh(pre)


# ---------------- Pallas kernels (one grid step = TB batch rows) --------------

def _dot_kernel(h_ref, enc_ref, wc1_ref, wc2_ref, wcb_ref, out_ref):
    # Inputs may be bf16 (halved HBM traffic); all VPU/EUP math runs in f32
    # (v5e has no bf16 VALU/EUP; on v6e/v7x the converts are free filler).
    h = h_ref[...].astype(jnp.float32)                   # (TB, H)
    enc = enc_ref[...].astype(jnp.float32)               # (TB, L, H)
    score = jnp.sum(enc * h[:, None, :], axis=-1)        # (TB, L)
    context = _attend(score, enc)
    out_ref[...] = _output(context, h, wc1_ref[...], wc2_ref[...],
                           wcb_ref[...]).astype(out_ref.dtype)


def _general_kernel(h_ref, enc_ref, wa_ref, wab_ref,
                    wc1_ref, wc2_ref, wcb_ref, out_ref):
    h = h_ref[...].astype(jnp.float32)                   # (TB, H)
    enc = enc_ref[...].astype(jnp.float32)               # (TB, L, H)
    # score = enc . (h @ Wa_w) + h . Wa_b   (no (L, H) energy intermediate)
    g = jnp.dot(h, wa_ref[...], preferred_element_type=jnp.float32)    # (TB, H)
    bias = jnp.sum(h * wab_ref[...], axis=-1, keepdims=True)           # (TB, 1)
    score = jnp.sum(enc * g[:, None, :], axis=-1) + bias               # (TB, L)
    context = _attend(score, enc)
    out_ref[...] = _output(context, h, wc1_ref[...], wc2_ref[...],
                           wcb_ref[...]).astype(out_ref.dtype)


def _concat_kernel(h_ref, enc_ref, wa1_ref, wa2_ref, wab_ref, v_ref,
                   wc1_ref, wc2_ref, wcb_ref, out_ref, *, lc):
    h = h_ref[...].astype(jnp.float32)                   # (TB, H)
    TB, H = h.shape
    L = enc_ref.shape[1]
    # h @ Wa1 hoisted out of the L dimension.
    hw = (jnp.dot(h, wa1_ref[...], preferred_element_type=jnp.float32)
          + wab_ref[...])                                # (TB, H)
    wa2 = wa2_ref[...]
    v = v_ref[...]

    def score_chunk(enc_c):                              # enc_c: (TB, n, H) f32
        n = enc_c.shape[1]
        ew = jnp.dot(enc_c.reshape(TB * n, H), wa2,
                     preferred_element_type=jnp.float32).reshape(TB, n, H)
        # Kept in f32 for numerical parity with the reference; on v6e/v7x a
        # bf16 tanh roughly doubles EUP throughput (not available on v5e).
        energy = jnp.tanh(ew + hw[:, None, :])
        return jnp.sum(energy * v[None], axis=-1)        # (TB, n)

    if lc >= L:
        enc = enc_ref[...].astype(jnp.float32)
        score = score_chunk(enc)
    else:
        # Chunk L so the (TB, L, H) f32 ew/energy temporaries never live in
        # full (they would otherwise ~3x the per-step VMEM footprint).
        def body(c, score):
            start = pl.multiple_of(c * lc, lc)
            enc_c = enc_ref[:, pl.ds(start, lc), :].astype(jnp.float32)
            return lax.dynamic_update_slice(score, score_chunk(enc_c),
                                            (0, c * lc))
        score = lax.fori_loop(0, L // lc, body,
                              jnp.zeros((TB, L), jnp.float32))
        enc = enc_ref[...].astype(jnp.float32)

    context = _attend(score, enc)
    out_ref[...] = _output(context, h, wc1_ref[...], wc2_ref[...],
                           wcb_ref[...]).astype(out_ref.dtype)


# ---------------- params ------------------------------------------------------

def init_params(key, score_name, hidden_size):
    H = hidden_size
    ks = jax.random.split(key, 6)
    params = {}
    s1 = 1.0 / (H ** 0.5)
    s2 = 1.0 / ((2 * H) ** 0.5)
    if score_name == 'general':
        params['Wa_w'] = jax.random.uniform(ks[0], (H, H), jnp.float32, -s1, s1)
        params['Wa_b'] = jax.random.uniform(ks[1], (H,), jnp.float32, -s1, s1)
    elif score_name == 'concat':
        params['Wa_w'] = jax.random.uniform(ks[0], (H, 2 * H), jnp.float32, -s2, s2)
        params['Wa_b'] = jax.random.uniform(ks[1], (H,), jnp.float32, -s2, s2)
        params['v'] = jax.random.uniform(ks[2], (H,), jnp.float32, -1.0, 1.0)
    params['Wc_w'] = jax.random.uniform(ks[3], (H, 2 * H), jnp.float32, -s2, s2)
    params['Wc_b'] = jax.random.uniform(ks[4], (H,), jnp.float32, -s2, s2)
    return params


def prepare_params(score_name, params):
    """One-time weight preprocessing (hoisted out of the per-call wrapper)."""
    H = params['Wc_w'].shape[0]
    wc_t = params['Wc_w'].T                        # (2H, H)
    prep = {'wc1': wc_t[:H],                       # context half
            'wc2': wc_t[H:],                       # hidden half
            'wcb': params['Wc_b'].reshape(1, H)}
    if score_name == 'general':
        prep['wa'] = params['Wa_w']                # used as h @ Wa_w (no transpose)
        prep['wab'] = params['Wa_b'].reshape(1, H)
    elif score_name == 'concat':
        wa_t = params['Wa_w'].T                    # (2H, H)
        prep['wa1'] = wa_t[:H]                     # hidden half
        prep['wa2'] = wa_t[H:]                     # encoder half
        prep['wab'] = params['Wa_b'].reshape(1, H)
        prep['v'] = params['v'].reshape(1, H)
    return prep


# ---------------- wrapper ------------------------------------------------------

def luong_attention(score_name, prep, current_hidden, encoder_output,
                    compute_dtype=jnp.bfloat16):
    """Pallas forward pass.

    compute_dtype=bfloat16 halves enc HBM traffic (dot/general are
    enc-bandwidth-bound); all accumulation stays f32.  In a real pipeline the
    encoder should emit bf16 directly so the cast below fuses upstream.
    """
    B, _, H = current_hidden.shape
    _, L, _ = encoder_output.shape

    h2 = current_hidden.reshape(B, H).astype(compute_dtype)
    enc = encoder_output.astype(compute_dtype)
    enc_item = jnp.dtype(compute_dtype).itemsize

    lc = _l_chunk(L)
    vmem_limit = _vmem_limit_bytes()
    TB = _pick_batch_tile(B, L, H, score_name, enc_item, lc, vmem_limit)
    n_blocks = pl.cdiv(B, TB)
    # No wrapper-side jnp.pad: a ragged last batch block is handled by Pallas
    # partial blocks (OOB reads hit only independent padded rows; OOB writes
    # are dropped), so the encoder tensor is never copied through HBM.

    if score_name == 'dot':
        kernel = _dot_kernel
        weights = (prep['wc1'], prep['wc2'], prep['wcb'])
        w_kinds = 'MMv'
        flops = 4 * B * L * H + 4 * B * H * H
        transc = B * (L + H)
    elif score_name == 'general':
        kernel = _general_kernel
        weights = (prep['wa'], prep['wab'], prep['wc1'], prep['wc2'], prep['wcb'])
        w_kinds = 'MvMMv'
        flops = 6 * B * L * H + 6 * B * H * H
        transc = B * (L + H)
    elif score_name == 'concat':
        kernel = functools.partial(_concat_kernel, lc=lc)
        weights = (prep['wa1'], prep['wa2'], prep['wab'], prep['v'],
                   prep['wc1'], prep['wc2'], prep['wcb'])
        w_kinds = 'MMvvMMv'
        flops = 2 * B * L * H * H + 6 * B * L * H + 6 * B * H * H
        transc = B * (L + H + L * H)
    else:
        raise ValueError(score_name,
                         'is not an appropriate attention score_name')

    wbytes = sum(int(w.size) * 4 for w in weights)
    cost = pl.CostEstimate(
        flops=int(flops), transcendentals=int(transc),
        bytes_accessed=int(enc_item * (B * L * H + B * H) + 4 * B * H + wbytes))

    def build_and_call(single_buffer_weights):
        kw = ({'pipeline_mode': pl.Buffered(1)} if single_buffer_weights else {})
        h_spec = pl.BlockSpec((TB, H), lambda b: (b, 0))
        enc_spec = pl.BlockSpec((TB, L, H), lambda b: (b, 0, 0))
        mat_spec = pl.BlockSpec((H, H), lambda b: (0, 0), **kw)
        vec_spec = pl.BlockSpec((1, H), lambda b: (0, 0), **kw)
        out_spec = pl.BlockSpec((TB, H), lambda b: (b, 0))
        w_specs = [mat_spec if k == 'M' else vec_spec for k in w_kinds]
        return pl.pallas_call(
            kernel,
            out_shape=jax.ShapeDtypeStruct((B, H), jnp.float32),
            grid=(n_blocks,),
            in_specs=[h_spec, enc_spec] + w_specs,
            out_specs=out_spec,
            compiler_params=pltpu.CompilerParams(
                dimension_semantics=("parallel",),
                vmem_limit_bytes=vmem_limit),
            cost_estimate=cost,
        )(h2, enc, *weights)

    try:
        # Constant-index weight blocks never change across grid steps; single-
        # buffering them returns 2-4 * H^2 * 4 bytes of VMEM to the enc tile.
        out2 = build_and_call(True)
    except Exception:
        # Fallback for JAX versions without Buffered(1) support on pallas_call.
        out2 = build_and_call(False)

    return out2.reshape(B, 1, H)


# ---------------- pure-JAX reference (mirrors the PyTorch forward) ------------

def reference(score_name, params, h, enc):
    if score_name == 'dot':
        score = jnp.sum(enc * h, axis=2)
    elif score_name == 'general':
        energy = enc @ params['Wa_w'].T + params['Wa_b']
        score = jnp.sum(energy * h, axis=2)
    else:
        cat = jnp.concatenate([jnp.broadcast_to(h, enc.shape), enc], axis=2)
        energy = jnp.tanh(cat @ params['Wa_w'].T + params['Wa_b'])
        score = jnp.sum(params['v'] * energy, axis=2)
    attn = jax.nn.softmax(score, axis=1)
    context = jnp.sum(enc * attn[:, :, None], axis=1)
    cat2 = jnp.concatenate([context[:, None, :], h], axis=2)
    return jnp.tanh(cat2 @ params['Wc_w'].T + params['Wc_b'])


if __name__ == "__main__":
    B, L, H = 2, 8, 32
    key = jax.random.PRNGKey(0)
    k_h, k_e, k_p = jax.random.split(key, 3)
    current_hidden = jax.random.normal(k_h, (B, 1, H), jnp.float32)
    encoder_output = jax.random.normal(k_e, (B, L, H), jnp.float32)

    # The kernel ingests bf16 activations (halved HBM traffic); compare against
    # the pure-JAX reference evaluated on the same bf16-rounded inputs so the
    # check isolates kernel correctness from input quantization.
    h_q = current_hidden.astype(jnp.bfloat16).astype(jnp.float32)
    e_q = encoder_output.astype(jnp.bfloat16).astype(jnp.float32)

    for name in ('dot', 'general', 'concat'):
        params = init_params(k_p, name, H)
        prep = prepare_params(name, params)
        out = luong_attention(name, prep, current_hidden, encoder_output)
        out = jax.block_until_ready(out)
        ref = reference(name, params, h_q, e_q)
        assert out.shape == (B, 1, H), out.shape
        # Tolerance covers the approx EUP reciprocal in the softmax and the
        # reordered (but mathematically identical) f32 accumulation.
        err = jnp.max(jnp.abs(out - ref))
        assert jnp.allclose(out, ref, rtol=5e-3, atol=5e-3), \
            f"mismatch for score_name={name}: {err}"

    print("KERNEL_OK")
</pallas_src>

<mosaic_0001>
module attributes {stable_mosaic.version = 11 : i64} {
  func.func @_dot_kernel(%arg0: i32, %arg1: memref<2x32xbf16, #tpu.memory_space<vmem>>, %arg2: memref<2x8x32xbf16, #tpu.memory_space<vmem>>, %arg3: memref<32x32xf32, #tpu.memory_space<vmem>>, %arg4: memref<32x32xf32, #tpu.memory_space<vmem>>, %arg5: memref<1x32xf32, #tpu.memory_space<vmem>>, %arg6: memref<2x32xf32, #tpu.memory_space<vmem>>) attributes {dimension_semantics = [#tpu.dimension_semantics<parallel>], iteration_bounds = array<i64: 1>, scalar_prefetch = 0 : i64, scratch_operands = 0 : i64, tpu.core_type = #tpu.core_type<tc>, window_params = [{transform_indices = @transform_0, window_bounds = array<i64: 2, 32>}, {transform_indices = @transform_1, window_bounds = array<i64: 2, 8, 32>}, {pipeline_mode = #tpu.pipeline_mode<synchronous>, transform_indices = @transform_2, window_bounds = array<i64: 32, 32>}, {pipeline_mode = #tpu.pipeline_mode<synchronous>, transform_indices = @transform_3, window_bounds = array<i64: 32, 32>}, {pipeline_mode = #tpu.pipeline_mode<synchronous>, transform_indices = @transform_4, window_bounds = array<i64: 1, 32>}, {transform_indices = @transform_5, window_bounds = array<i64: 2, 32>}]} {
    %c0 = arith.constant 0 : index
    %c0_0 = arith.constant 0 : index
    %0 = vector.load %arg1[%c0, %c0_0] : memref<2x32xbf16, #tpu.memory_space<vmem>>, vector<2x32xbf16>
    %1 = arith.extf %0 : vector<2x32xbf16> to vector<2x32xf32>
    %c0_1 = arith.constant 0 : index
    %c0_2 = arith.constant 0 : index
    %c0_3 = arith.constant 0 : index
    %2 = vector.load %arg2[%c0_1, %c0_2, %c0_3] : memref<2x8x32xbf16, #tpu.memory_space<vmem>>, vector<2x8x32xbf16>
    %3 = arith.extf %2 : vector<2x8x32xbf16> to vector<2x8x32xf32>
    %4 = vector.shape_cast %1 : vector<2x32xf32> to vector<2x1x32xf32>
    %5 = vector.broadcast %4 : vector<2x1x32xf32> to vector<2x8x32xf32>
    %6 = arith.mulf %3, %5 : vector<2x8x32xf32>
    %cst = arith.constant dense<0.000000e+00> : vector<2x8xf32>
    %7 = vector.multi_reduction <add>, %6, %cst [2] : vector<2x8x32xf32> to vector<2x8xf32>
    %cst_4 = arith.constant dense<0xFF800000> : vector<2xf32>
    %8 = vector.multi_reduction <maximumf>, %7, %cst_4 [1] : vector<2x8xf32> to vector<2xf32>
    %9 = vector.shape_cast %8 : vector<2xf32> to vector<2x1xf32>
    %10 = vector.broadcast %9 : vector<2x1xf32> to vector<2x8xf32>
    %11 = arith.subf %7, %10 : vector<2x8xf32>
    %12 = math.exp %11 : vector<2x8xf32>
    %cst_5 = arith.constant dense<0.000000e+00> : vector<2xf32>
    %13 = vector.multi_reduction <add>, %12, %cst_5 [1] : vector<2x8xf32> to vector<2xf32>
    %14 = vector.shape_cast %13 : vector<2xf32> to vector<2x1xf32>
    %15 = tpu.reciprocal %14 {approx = true} : vector<2x1xf32> -> vector<2x1xf32>
    %16 = vector.broadcast %15 : vector<2x1xf32> to vector<2x8xf32>
    %17 = arith.mulf %12, %16 : vector<2x8xf32>
    %18 = vector.shape_cast %17 : vector<2x8xf32> to vector<2x8x1xf32>
    %19 = vector.broadcast %18 : vector<2x8x1xf32> to vector<2x8x32xf32>
    %20 = arith.mulf %19, %3 : vector<2x8x32xf32>
    %cst_6 = arith.constant dense<0.000000e+00> : vector<2x32xf32>
    %21 = vector.multi_reduction <add>, %20, %cst_6 [1] : vector<2x8x32xf32> to vector<2x32xf32>
    %c0_7 = arith.constant 0 : index
    %c0_8 = arith.constant 0 : index
    %22 = vector.load %arg3[%c0_7, %c0_8] : memref<32x32xf32, #tpu.memory_space<vmem>>, vector<32x32xf32>
    %c0_9 = arith.constant 0 : index
    %c0_10 = arith.constant 0 : index
    %23 = vector.load %arg4[%c0_9, %c0_10] : memref<32x32xf32, #tpu.memory_space<vmem>>, vector<32x32xf32>
    %c0_11 = arith.constant 0 : index
    %c0_12 = arith.constant 0 : index
    %24 = vector.load %arg5[%c0_11, %c0_12] : memref<1x32xf32, #tpu.memory_space<vmem>>, vector<1x32xf32>
    %cst_13 = arith.constant dense<0.000000e+00> : vector<2x32xf32>
    %25 = tpu.matmul %21, %22, %cst_13 {dimension_numbers = #tpu.dot_dimension_numbers<[1], [0], [0], [1], [0, 0, 1, 1], [], []>} : vector<2x32xf32>, vector<32x32xf32>, vector<2x32xf32> -> vector<2x32xf32>
    %cst_14 = arith.constant dense<0.000000e+00> : vector<2x32xf32>
    %26 = tpu.matmul %1, %23, %cst_14 {dimension_numbers = #tpu.dot_dimension_numbers<[1], [0], [0], [1], [0, 0, 1, 1], [], []>} : vector<2x32xf32>, vector<32x32xf32>, vector<2x32xf32> -> vector<2x32xf32>
    %27 = arith.addf %25, %26 : vector<2x32xf32>
    %28 = vector.broadcast %24 : vector<1x32xf32> to vector<2x32xf32>
    %29 = arith.addf %27, %28 : vector<2x32xf32>
    %30 = math.tanh %29 : vector<2x32xf32>
    %c0_15 = arith.constant 0 : index
    %c0_16 = arith.constant 0 : index
    %31 = vector.load %arg6[%c0_15, %c0_16] : memref<2x32xf32, #tpu.memory_space<vmem>>, vector<2x32xf32>
    tpu.vector_store %arg6[%c0_15, %c0_16], %30 {strides = array<i32>} : memref<2x32xf32, #tpu.memory_space<vmem>>, vector<2x32xf32>,
    return
  }
  func.func @transform_0(%arg0: i32) -> (i32, i32) {
    %c0_i32 = arith.constant 0 : i32
    %c0_i32_0 = arith.constant 0 : i32
    return %arg0, %c0_i32 : i32, i32
  }
  func.func @transform_1(%arg0: i32) -> (i32, i32, i32) {
    %c0_i32 = arith.constant 0 : i32
    %c0_i32_0 = arith.constant 0 : i32
    %c0_i32_1 = arith.constant 0 : i32
    return %arg0, %c0_i32, %c0_i32_0 : i32, i32, i32
  }
  func.func @transform_2(%arg0: i32) -> (i32, i32) {
    %c0_i32 = arith.constant 0 : i32
    %c0_i32_0 = arith.constant 0 : i32
    %c0_i32_1 = arith.constant 0 : i32
    return %c0_i32, %c0_i32_0 : i32, i32
  }
  func.func @transform_3(%arg0: i32) -> (i32, i32) {
    %c0_i32 = arith.constant 0 : i32
    %c0_i32_0 = arith.constant 0 : i32
    %c0_i32_1 = arith.constant 0 : i32
    return %c0_i32, %c0_i32_0 : i32, i32
  }
  func.func @transform_4(%arg0: i32) -> (i32, i32) {
    %c0_i32 = arith.constant 0 : i32
    %c0_i32_0 = arith.constant 0 : i32
    %c0_i32_1 = arith.constant 0 : i32
    return %c0_i32, %c0_i32_0 : i32, i32
  }
  func.func @transform_5(%arg0: i32) -> (i32, i32) {
    %c0_i32 = arith.constant 0 : i32
    %c0_i32_0 = arith.constant 0 : i32
    return %arg0, %c0_i32 : i32, i32
  }
}

module attributes {stable_mosaic.version = 11 : i64} {
  func.func @_dot_kernel(%arg0: i32, %arg1: memref<2x32xbf16, #tpu.memory_space<vmem>>, %arg2: memref<2x8x32xbf16, #tpu.memory_space<vmem>>, %arg3: memref<32x32xf32, #tpu.memory_space<vmem>>, %arg4: memref<32x32xf32, #tpu.memory_space<vmem>>, %arg5: memref<1x32xf32, #tpu.memory_space<vmem>>, %arg6: memref<2x32xf32, #tpu.memory_space<vmem>>) attributes {dimension_semantics = [#tpu.dimension_semantics<parallel>], iteration_bounds = array<i64: 1>, scalar_prefetch = 0 : i64, scratch_operands = 0 : i64, tpu.core_type = #tpu.core_type<tc>, window_params = [{transform_indices = @transform_0, window_bounds = array<i64: 2, 32>}, {transform_indices = @transform_1, window_bounds = array<i64: 2, 8, 32>}, {pipeline_mode = #tpu.pipeline_mode<synchronous>, transform_indices = @transform_2, window_bounds = array<i64: 32, 32>}, {pipeline_mode = #tpu.pipeline_mode<synchronous>, transform_indices = @transform_3, window_bounds = array<i64: 32, 32>}, {pipeline_mode = #tpu.pipeline_mode<synchronous>, transform_indices = @transform_4, window_bounds = array<i64: 1, 32>}, {transform_indices = @transform_5, window_bounds = array<i64: 2, 32>}]} {
    %c0 = arith.constant 0 : index
    %c0_0 = arith.constant 0 : index
    %0 = vector.load %arg1[%c0, %c0_0] : memref<2x32xbf16, #tpu.memory_space<vmem>>, vector<2x32xbf16>
    %1 = arith.extf %0 : vector<2x32xbf16> to vector<2x32xf32>
    %c0_1 = arith.constant 0 : index
    %c0_2 = arith.constant 0 : index
    %c0_3 = arith.constant 0 : index
    %2 = vector.load %arg2[%c0_1, %c0_2, %c0_3] : memref<2x8x32xbf16, #tpu.memory_space<vmem>>, vector<2x8x32xbf16>
    %3 = arith.extf %2 : vector<2x8x32xbf16> to vector<2x8x32xf32>
    %4 = vector.shape_cast %1 : vector<2x32xf32> to vector<2x1x32xf32>
    %5 = vector.broadcast %4 : vector<2x1x32xf32> to vector<2x8x32xf32>
    %6 = arith.mulf %3, %5 : vector<2x8x32xf32>
    %cst = arith.constant dense<0.000000e+00> : vector<2x8xf32>
    %7 = vector.multi_reduction <add>, %6, %cst [2] : vector<2x8x32xf32> to vector<2x8xf32>
    %cst_4 = arith.constant dense<0xFF800000> : vector<2xf32>
    %8 = vector.multi_reduction <maximumf>, %7, %cst_4 [1] : vector<2x8xf32> to vector<2xf32>
    %9 = vector.shape_cast %8 : vector<2xf32> to vector<2x1xf32>
    %10 = vector.broadcast %9 : vector<2x1xf32> to vector<2x8xf32>
    %11 = arith.subf %7, %10 : vector<2x8xf32>
    %12 = math.exp %11 : vector<2x8xf32>
    %cst_5 = arith.constant dense<0.000000e+00> : vector<2xf32>
    %13 = vector.multi_reduction <add>, %12, %cst_5 [1] : vector<2x8xf32> to vector<2xf32>
    %14 = vector.shape_cast %13 : vector<2xf32> to vector<2x1xf32>
    %15 = tpu.reciprocal %14 {approx = true} : vector<2x1xf32> -> vector<2x1xf32>
    %16 = vector.broadcast %15 : vector<2x1xf32> to vector<2x8xf32>
    %17 = arith.mulf %12, %16 : vector<2x8xf32>
    %18 = vector.shape_cast %17 : vector<2x8xf32> to vector<2x8x1xf32>
    %19 = vector.broadcast %18 : vector<2x8x1xf32> to vector<2x8x32xf32>
    %20 = arith.mulf %19, %3 : vector<2x8x32xf32>
    %cst_6 = arith.constant dense<0.000000e+00> : vector<2x32xf32>
    %21 = vector.multi_reduction <add>, %20, %cst_6 [1] : vector<2x8x32xf32> to vector<2x32xf32>
    %c0_7 = arith.constant 0 : index
    %c0_8 = arith.constant 0 : index
    %22 = vector.load %arg3[%c0_7, %c0_8] : memref<32x32xf32, #tpu.memory_space<vmem>>, vector<32x32xf32>
    %c0_9 = arith.constant 0 : index
    %c0_10 = arith.constant 0 : index
    %23 = vector.load %arg4[%c0_9, %c0_10] : memref<32x32xf32, #tpu.memory_space<vmem>>, vector<32x32xf32>
    %c0_11 = arith.constant 0 : index
    %c0_12 = arith.constant 0 : index
    %24 = vector.load %arg5[%c0_11, %c0_12] : memref<1x32xf32, #tpu.memory_space<vmem>>, vector<1x32xf32>
    %cst_13 = arith.constant dense<0.000000e+00> : vector<2x32xf32>
    %25 = tpu.matmul %21, %22, %cst_13 {dimension_numbers = #tpu.dot_dimension_numbers<[1], [0], [0], [1], [0, 0, 1, 1], [], []>} : vector<2x32xf32>, vector<32x32xf32>, vector<2x32xf32> -> vector<2x32xf32>
    %cst_14 = arith.constant dense<0.000000e+00> : vector<2x32xf32>
    %26 = tpu.matmul %1, %23, %cst_14 {dimension_numbers = #tpu.dot_dimension_numbers<[1], [0], [0], [1], [0, 0, 1, 1], [], []>} : vector<2x32xf32>, vector<32x32xf32>, vector<2x32xf32> -> vector<2x32xf32>
    %27 = arith.addf %25, %26 : vector<2x32xf32>
    %28 = vector.broadcast %24 : vector<1x32xf32> to vector<2x32xf32>
    %29 = arith.addf %27, %28 : vector<2x32xf32>
    %30 = math.tanh %29 : vector<2x32xf32>
    %c0_15 = arith.constant 0 : index
    %c0_16 = arith.constant 0 : index
    %31 = vector.load %arg6[%c0_15, %c0_16] : memref<2x32xf32, #tpu.memory_space<vmem>>, vector<2x32xf32>
    tpu.vector_store %arg6[%c0_15, %c0_16], %30 {strides = array<i32>} : memref<2x32xf32, #tpu.memory_space<vmem>>, vector<2x32xf32>,
    return
  }
  func.func @transform_0(%arg0: i32) -> (i32, i32) {
    %c0_i32 = arith.constant 0 : i32
    %c0_i32_0 = arith.constant 0 : i32
    return %arg0, %c0_i32 : i32, i32
  }
  func.func @transform_1(%arg0: i32) -> (i32, i32, i32) {
    %c0_i32 = arith.constant 0 : i32
    %c0_i32_0 = arith.constant 0 : i32
    %c0_i32_1 = arith.constant 0 : i32
    return %arg0, %c0_i32, %c0_i32_0 : i32, i32, i32
  }
  func.func @transform_2(%arg0: i32) -> (i32, i32) {
    %c0_i32 = arith.constant 0 : i32
    %c0_i32_0 = arith.constant 0 : i32
    %c0_i32_1 = arith.constant 0 : i32
    return %c0_i32, %c0_i32_0 : i32, i32
  }
  func.func @transform_3(%arg0: i32) -> (i32, i32) {
    %c0_i32 = arith.constant 0 : i32
    %c0_i32_0 = arith.constant 0 : i32
    %c0_i32_1 = arith.constant 0 : i32
    return %c0_i32, %c0_i32_0 : i32, i32
  }
  func.func @transform_4(%arg0: i32) -> (i32, i32) {
    %c0_i32 = arith.constant 0 : i32
    %c0_i32_0 = arith.constant 0 : i32
    %c0_i32_1 = arith.constant 0 : i32
    return %c0_i32, %c0_i32_0 : i32, i32
  }
  func.func @transform_5(%arg0: i32) -> (i32, i32) {
    %c0_i32 = arith.constant 0 : i32
    %c0_i32_0 = arith.constant 0 : i32
    return %arg0, %c0_i32 : i32, i32
  }
}

</mosaic_0001>

<llo_original>
// kernel: tpu_custom_call.1
$region0: #{tpu_custom_call.1}
  #allocation0 [shape = 'u32[]', space=smem, size = 0x4, offset = 0x4, fixed_abs, tag = 'smem constant byte address 0x4 - core index']
  #allocation1 [shape = 'u32[144,128]{1,0:T(1,128)}', space=vmem, size = 0x12000, scoped, tag = 'internal scratch']
  %s0 = inlined_call_operand.hbm [shape: bf16[2,32], index: 0, kind: input, shape index: {}]
  %s1 = inlined_call_operand.hbm [shape: bf16[2,8,32], index: 1, kind: input, shape index: {}]
  %s2 = inlined_call_operand.hbm [shape: f32[32,32], index: 2, kind: input, shape index: {}]
  %s3 = inlined_call_operand.hbm [shape: f32[32,32], index: 3, kind: input, shape index: {}]
  %s4 = inlined_call_operand.vmem [shape: f32[1,32], index: 4, kind: input, shape index: {}]
  %s5 = inlined_call_operand.hbm [shape: f32[2,32], index: 5, kind: output, shape index: {}]
  %s6 = sld [smem:[#allocation0]]
  $region46: #{tpu_custom_call.1} parent=0
    _
  %s8 = ssub.s32 1, %s6
  %s9 = scalar_select 0, %s8, %s6
  $region1: #{tpu_custom_call.1} parent=0
    #allocation2 [shape = 'u8[512]{0}', space=vmem, size = 0x400, scoped, tag = 'input window, operand 0, single buffered']
    #allocation3 [shape = 's32[1]{0}', space=sflag, size = 0x4, scoped, tag = 'scoped memory for tpu_custom_call.1']
    #allocation4 [shape = 's32[1]{0}', space=sflag, size = 0x4, scoped, tag = 'scoped memory for tpu_custom_call.1']
    #allocation5 [shape = 'u8[4096]{0}', space=vmem, size = 0x1000, scoped, tag = 'input window, operand 1, single buffered']
    #allocation6 [shape = 's32[1]{0}', space=sflag, size = 0x4, scoped, tag = 'scoped memory for tpu_custom_call.1']
    #allocation7 [shape = 'u8[16384]{0}', space=vmem, size = 0x4000, scoped, tag = 'input window, operand 2, single buffered']
    #allocation8 [shape = 'u8[16384]{0}', space=vmem, size = 0x4000, scoped, tag = 'input window, operand 3, single buffered']
    #allocation9 [shape = 's32[1]{0}', space=sflag, size = 0x4, scoped, tag = 'scoped memory for tpu_custom_call.1']
    #allocation10 [shape = 'u8[1024]{0}', space=vmem, size = 0x400, scoped, tag = 'output window, operand 0, single buffered']
    %10 = vsyncpa [#allocation3], 0
    %11 = vsyncpa [#allocation6], 0
    %12 = vsyncpa [#allocation9], 0
    %13 = vsyncpa [#allocation4], 0
    // Predicated region
    $region2: #{tpu_custom_call.1} parent=1 // pred_check
      _
    $region3: #{tpu_custom_call.1} parent=1 // pred_check_branch
      %15 = sbr.rel (0) target = $region5
    $region4: #{tpu_custom_call.1} parent=1 // pred_region
      %s17 = ssub.s32 16, 16
      %18 = vsyncadd [#allocation3], %s17
      %s20 = sshll.u32 [#allocation2], 4
      %s21 = int_to_ptr.vmem [resolvable:$true] %s20
      %23 = dma.hbm_to_vmem [thread:$0]  %s0, 16, %s21, [#allocation3]
    $region5: #{tpu_custom_call.1} parent=1 // pred_fallthru
      _
    // Predicated region
    $region6: #{tpu_custom_call.1} parent=1 // pred_check
      _
    $region7: #{tpu_custom_call.1} parent=1 // pred_check_branch
      %25 = sbr.rel (0) target = $region9
    $region8: #{tpu_custom_call.1} parent=1 // pred_region
      %s27 = ssub.s32 128, 128
      %28 = vsyncadd [#allocation6], %s27
      %s29 = sshll.u32 [#allocation5], 4
      %s30 = int_to_ptr.vmem [resolvable:$true] %s29
      %35 = dma.hbm_to_vmem [thread:$0]  %s1, 128, %s30, [#allocation6], 64, 64, 4
    $region9: #{tpu_custom_call.1} parent=1 // pred_fallthru
      _
    // Predicated region
    $region10: #{tpu_custom_call.1} parent=1 // pred_check
      _
    $region11: #{tpu_custom_call.1} parent=1 // pred_check_branch
      %37 = sbr.rel (0) target = $region13
    $region12: #{tpu_custom_call.1} parent=1 // pred_region
      %s39 = ssub.s32 512, 512
      %40 = vsyncadd [#allocation6], %s39
      %s41 = sshll.u32 [#allocation7], 4
      %s42 = int_to_ptr.vmem [resolvable:$true] %s41
      %47 = dma.hbm_to_vmem [thread:$0]  %s2, 512, %s42, [#allocation6], 128, 128, 8
    $region13: #{tpu_custom_call.1} parent=1 // pred_fallthru
      _
    // Predicated region
    $region14: #{tpu_custom_call.1} parent=1 // pred_check
      _
    $region15: #{tpu_custom_call.1} parent=1 // pred_check_branch
      %49 = sbr.rel (0) target = $region17
    $region16: #{tpu_custom_call.1} parent=1 // pred_region
      %s51 = ssub.s32 512, 512
      %52 = vsyncadd [#allocation9], %s51
      %s53 = sshll.u32 [#allocation8], 4
      %s54 = int_to_ptr.vmem [resolvable:$true] %s53
      %59 = dma.hbm_to_vmem [thread:$0]  %s3, 512, %s54, [#allocation9], 128, 128, 8
    $region17: #{tpu_custom_call.1} parent=1 // pred_fallthru
      _
    // Predicated region
    $region18: #{tpu_custom_call.1} parent=1 // pred_check
      _
    $region19: #{tpu_custom_call.1} parent=1 // pred_check_branch
      %61 = sbr.rel (0) target = $region21
    $region20: #{tpu_custom_call.1} parent=1 // pred_region
      _
    $region21: #{tpu_custom_call.1} parent=1 // pred_fallthru
      _
    // Predicated region
    $region22: #{tpu_custom_call.1} parent=1 // pred_check
      _
    $region23: #{tpu_custom_call.1} parent=1 // pred_check_branch
      %63 = sbr.rel (0) target = $region25
    $region24: #{tpu_custom_call.1} parent=1 // pred_region
      %64 = dma.done [#allocation3], 16
    $region25: #{tpu_custom_call.1} parent=1 // pred_fallthru
      _
    // Predicated region
    $region26: #{tpu_custom_call.1} parent=1 // pred_check
      _
    $region27: #{tpu_custom_call.1} parent=1 // pred_check_branch
      %66 = sbr.rel (0) target = $region29
    $region28: #{tpu_custom_call.1} parent=1 // pred_region
      %67 = dma.done [#allocation6], 128
    $region29: #{tpu_custom_call.1} parent=1 // pred_fallthru
      _
    // Predicated region
    $region30: #{tpu_custom_call.1} parent=1 // pred_check
      _
    $region31: #{tpu_custom_call.1} parent=1 // pred_check_branch
      %69 = sbr.rel (0) target = $region33
    $region32: #{tpu_custom_call.1} parent=1 // pred_region
      %70 = dma.done [#allocation6], 512
    $region33: #{tpu_custom_call.1} parent=1 // pred_fallthru
      _
    // Predicated region
    $region34: #{tpu_custom_call.1} parent=1 // pred_check
      _
    $region35: #{tpu_custom_call.1} parent=1 // pred_check_branch
      %72 = sbr.rel (0) target = $region37
    $region36: #{tpu_custom_call.1} parent=1 // pred_region
      %73 = dma.done [#allocation9], 512
    $region37: #{tpu_custom_call.1} parent=1 // pred_fallthru
      _
    %v74 = vld [vmem:[#allocation2] sm:$0x1]
    %v75 = vunpack.c.l.bf16 %v74
    %v76 = vld [vmem:[#allocation5] sm:$0xf]
    %v77 = vld [vmem:[#allocation5 + $0x4] sm:$0xf]
    %v78 = vunpack.c.l.bf16 %v76
    %v79 = vunpack.c.l.bf16 %v77
    %v82 = vunpack.c.l.s4 1966171168
    %v83 = vunpack.c.0.s8 %v82
    %v84 = vlaneseq
    %v85 = vshrl.u32 %v84, 7
    %v86 = vsub.s32 %v83, %v85
    %v87 = vrot.slane %v75, %v86
    %v88 = vcombine.high %v87, %v87
    %v89 = vlaneseq
    %v90 = vshrl.u32 %v89, 7
    %v91 = vsub.s32 0, %v90
    %v92 = vrot.slane %v87, %v91
    %v93 = vlaneseq
    %v94 = vshrl.u32 %v93, 7
    %v95 = vsub.s32 0, %v94
    %v96 = vrot.slane %v88, %v95
    %v99 = vmul.f32 %v78, %v92
    %v100 = vmul.f32 %v79, %v96
    %vm101 = vcmask 261120
    %v102 = vsel %vm101, %v99, 0.0
    %103 = vadd.xlane.f32.xlu0 %v102
    %v104 = vpop.xlane.xlu0 %103
    %v105 = vsel %vm101, %v100, 0.0
    %106 = vadd.xlane.f32.xlu0 %v105
    %v107 = vpop.xlane.xlu0 %106
    %v110 = vlaneseq
    %v111 = vand.u32 %v110, 127
    %v112 = vlaneseq
    %v113 = vshrl.u32 %v112, 7
    %v114 = vsub.s32 %v111, %v113
    %v115 = vrot.slane %v104, %v114
    %v116 = vlaneseq
    %v117 = vshrl.u32 %v116, 7
    %v118 = vsub.s32 %v111, %v117
    %v119 = vrot.slane %v107, %v118
    %vm120 = vcmask 1041409
    %v121 = vsel %vm120, %v119, %v115
    %vm123 = vcmask 58368
    %v124 = vsel %vm123, %v121, -inf
    %125 = vmax.xlane.f32.xlu0 %v124
    %v126 = vpop.xlane.xlu0 %125
    %v128 = vlaneseq
    %v129 = vshrl.u32 %v128, 7
    %v130 = vsub.s32 0, %v129
    %v131 = vrot.slane %v126, %v130
    %v132 = vlaneseq
    %v133 = vshrl.u32 %v132, 7
    %v134 = vsub.s32 1, %v133
    %v135 = vrot.slane %v126, %v134
    %v138 = vsub.f32 %v104, %v131
    %v139 = vsub.f32 %v107, %v135
    %v140 = vmul.f32 %v138, 1.442695
    %v141 = vpow.pop %v140
    %v142 = vmul.f32 %v139, 1.442695
    %v143 = vpow.pop %v142
    %146 = vset.pattern.permute.xlu0 0
    %147 = vperm.xlu0 %146, %v141
    %v148 = vpop.permute.xlu0 %147
    %149 = vset.pattern.permute.xlu0 0
    %150 = vperm.xlu0 %149, %v143
    %v151 = vpop.permute.xlu0 %150
    %v152 = vlaneseq
    %v153 = vshrl.u32 %v152, 7
    %v154 = vsub.s32 %v111, %v153
    %v155 = vrot.slane %v148, %v154
    %v156 = vlaneseq
    %v157 = vshrl.u32 %v156, 7
    %v158 = vsub.s32 %v111, %v157
    %v159 = vrot.slane %v151, %v158
    %v160 = vsel %vm120, %v159, %v155
    %v162 = vsel %vm123, %v160, 0.0
    %163 = vadd.xlane.f32.xlu0 %v162
    %v164 = vpop.xlane.xlu0 %163
    %v165 = vrcp.pop %v164
    %v167 = vlaneseq
    %v168 = vshrl.u32 %v167, 7
    %v169 = vsub.s32 0, %v168
    %v170 = vrot.slane %v165, %v169
    %v171 = vlaneseq
    %v172 = vshrl.u32 %v171, 7
    %v173 = vsub.s32 1, %v172
    %v174 = vrot.slane %v165, %v173
    %v177 = vmul.f32 %v141, %v170
    %v178 = vmul.f32 %v143, %v174
    %180 = vset.pattern.permute.xlu0 0
    %181 = vperm.xlu0 %180, %v177
    %v182 = vpop.permute.xlu0 %181
    %185 = vset.pattern.permute.xlu0 0
    %186 = vperm.xlu0 %185, %v178
    %v187 = vpop.permute.xlu0 %186
    %v189 = vmul.f32 %v182, %v78
    %v190 = vmul.f32 %v187, %v79
    %v191 = vsel %vm101, %v189, 0.0
    %v192 = vrot.slane %v191, 4
    %v193 = vadd.f32 %v191, %v192
    %v194 = vrot.slane %v193, 2
    %v195 = vadd.f32 %v193, %v194
    %v196 = vrot.slane %v195, 1
    %v197 = vadd.f32 %v195, %v196
    %v198 = vsel %vm101, %v190, 0.0
    %v199 = vrot.slane %v198, 4
    %v200 = vadd.f32 %v198, %v199
    %v201 = vrot.slane %v200, 2
    %v202 = vadd.f32 %v200, %v201
    %v203 = vrot.slane %v202, 1
    %v204 = vadd.f32 %v202, %v203
    %v205 = vld [vmem:[#allocation7] sm:$0xff]
    %v206 = vld [vmem:[#allocation7 + $0x8] sm:$0xff]
    %v207 = vld [vmem:[#allocation7 + $0x10] sm:$0xff]
    %v208 = vld [vmem:[#allocation7 + $0x18] sm:$0xff]
    %v209 = vld [vmem:[#allocation8] sm:$0xff]
    %v210 = vld [vmem:[#allocation8 + $0x8] sm:$0xff]
    %v211 = vld [vmem:[#allocation8 + $0x10] sm:$0xff]
    %v212 = vld [vmem:[#allocation8 + $0x18] sm:$0xff]
    %v213 = vld [vmem:[%s4] sm:$0x1]
    %v214 = vsel %vm101, %v75, 0
    %216 = vmatprep.subr.mxu0 0.0
    %217 = vmatpush1.msra.mxu0 %v209
    %218 = vmatprep.subr.mxu0 0.0
    %219 = vmatpush1.msra.mxu0 %v210
    %220 = vmatprep.subr.mxu0 0.0
    %221 = vmatpush1.msra.mxu0 %v211
    %222 = vmatprep.subr.mxu0 0.0
    %223 = vmatpush1.msra.mxu0 %v212
    %224 = vmatprep.subr.mxu0 0.0
    %225 = vmatpush1.msra.mxu0 0.0
    %226 = vmatprep.subr.mxu0 0.0
    %227 = vmatpush1.msra.mxu0 0.0
    %228 = vmatprep.subr.mxu0 0.0
    %229 = vmatpush1.msra.mxu0 0.0
    %230 = vmatprep.subr.mxu0 0.0
    %231 = vmatpush1.msra.mxu0 0.0
    %232 = vmatprep.subr.mxu0 0.0
    %233 = vmatpush1.msra.mxu0 0.0
    %234 = vmatprep.subr.mxu0 0.0
    %235 = vmatpush1.msra.mxu0 0.0
    %236 = vmatprep.subr.mxu0 0.0
    %237 = vmatpush1.msra.mxu0 0.0
    %238 = vmatprep.subr.mxu0 0.0
    %239 = vmatpush1.msra.mxu0 0.0
    %240 = vmatprep.subr.mxu0 0.0
    %241 = vmatpush1.msra.mxu0 0.0
    %242 = vmatprep.subr.mxu0 0.0
    %243 = vmatpush1.msra.mxu0 0.0
    %244 = vmatprep.subr.mxu0 0.0
    %245 = vmatpush1.msra.mxu0 0.0
    %246 = vmatprep.subr.mxu0 0.0
    %247 = vmatpush1.msra.mxu0 0.0
    %248 = vmatprep.subr.mxu0 0.0
    %249 = vmatpush1.msra.mxu0 0.0
    %250 = vmatprep.subr.mxu0 0.0
    %251 = vmatpush1.msra.mxu0 0.0
    %252 = vmatprep.subr.mxu0 0.0
    %253 = vmatpush1.msra.mxu0 0.0
    %254 = vmatprep.subr.mxu0 0.0
    %255 = vmatpush1.msra.mxu0 0.0
    %256 = vmatprep.subr.mxu0 0.0
    %257 = vmatpush1.msra.mxu0 0.0
    %258 = vmatprep.subr.mxu0 0.0
    %259 = vmatpush1.msra.mxu0 0.0
    %260 = vmatprep.subr.mxu0 0.0
    %261 = vmatpush1.msra.mxu0 0.0
    %262 = vmatprep.subr.mxu0 0.0
    %263 = vmatpush1.msra.mxu0 0.0
    %264 = vmatprep.subr.mxu0 0.0
    %265 = vmatpush1.msra.mxu0 0.0
    %266 = vmatprep.subr.mxu0 0.0
    %267 = vmatpush1.msra.mxu0 0.0
    %268 = vmatprep.subr.mxu0 0.0
    %269 = vmatpush1.msra.mxu0 0.0
    %270 = vmatprep.subr.mxu0 0.0
    %271 = vmatpush1.msra.mxu0 0.0
    %272 = vmatprep.subr.mxu0 0.0
    %273 = vmatpush1.msra.mxu0 0.0
    %274 = vmatprep.subr.mxu0 0.0
    %275 = vmatpush1.msra.mxu0 0.0
    %276 = vmatprep.subr.mxu0 0.0
    %277 = vmatpush1.msra.mxu0 0.0
    %278 = vmatprep.subr.mxu0 0.0
    %279 = vmatpush1.msra.mxu0 0.0
    %280 = vmatprep.mubr.f32.mxu0 0.0
    %281 = vmatmul.mubr.f32.gmra.mrb[0].mxu0 %v214
    %v282 = vpop.f32.mrb[0].mxu0
    %v283 = vadd.f32 0.0, %v282
    %v284 = vpop.f32.mrb[0].mxu0
    %285 = vdwg.mxu0
    %v288 = vsel %vm120, %v204, %v197
    %v289 = vsel %vm101, %v288, 0
    %291 = vmatprep.subr.mxu0 0.0
    %292 = vmatpush1.msra.mxu0 %v205
    %293 = vmatprep.subr.mxu0 0.0
    %294 = vmatpush1.msra.mxu0 %v206
    %295 = vmatprep.subr.mxu0 0.0
    %296 = vmatpush1.msra.mxu0 %v207
    %297 = vmatprep.subr.mxu0 0.0
    %298 = vmatpush1.msra.mxu0 %v208
    %299 = vmatprep.subr.mxu0 0.0
    %300 = vmatpush1.msra.mxu0 0.0
    %301 = vmatprep.subr.mxu0 0.0
    %302 = vmatpush1.msra.mxu0 0.0
    %303 = vmatprep.subr.mxu0 0.0
    %304 = vmatpush1.msra.mxu0 0.0
    %305 = vmatprep.subr.mxu0 0.0
    %306 = vmatpush1.msra.mxu0 0.0
    %307 = vmatprep.subr.mxu0 0.0
    %308 = vmatpush1.msra.mxu0 0.0
    %309 = vmatprep.subr.mxu0 0.0
    %310 = vmatpush1.msra.mxu0 0.0
    %311 = vmatprep.subr.mxu0 0.0
    %312 = vmatpush1.msra.mxu0 0.0
    %313 = vmatprep.subr.mxu0 0.0
    %314 = vmatpush1.msra.mxu0 0.0
    %315 = vmatprep.subr.mxu0 0.0
    %316 = vmatpush1.msra.mxu0 0.0
    %317 = vmatprep.subr.mxu0 0.0
    %318 = vmatpush1.msra.mxu0 0.0
    %319 = vmatprep.subr.mxu0 0.0
    %320 = vmatpush1.msra.mxu0 0.0
    %321 = vmatprep.subr.mxu0 0.0
    %322 = vmatpush1.msra.mxu0 0.0
    %323 = vmatprep.subr.mxu0 0.0
    %324 = vmatpush1.msra.mxu0 0.0
    %325 = vmatprep.subr.mxu0 0.0
    %326 = vmatpush1.msra.mxu0 0.0
    %327 = vmatprep.subr.mxu0 0.0
    %328 = vmatpush1.msra.mxu0 0.0
    %329 = vmatprep.subr.mxu0 0.0
    %330 = vmatpush1.msra.mxu0 0.0
    %331 = vmatprep.subr.mxu0 0.0
    %332 = vmatpush1.msra.mxu0 0.0
    %333 = vmatprep.subr.mxu0 0.0
    %334 = vmatpush1.msra.mxu0 0.0
    %335 = vmatprep.subr.mxu0 0.0
    %336 = vmatpush1.msra.mxu0 0.0
    %337 = vmatprep.subr.mxu0 0.0
    %338 = vmatpush1.msra.mxu0 0.0
    %339 = vmatprep.subr.mxu0 0.0
    %340 = vmatpush1.msra.mxu0 0.0
    %341 = vmatprep.subr.mxu0 0.0
    %342 = vmatpush1.msra.mxu0 0.0
    %343 = vmatprep.subr.mxu0 0.0
    %344 = vmatpush1.msra.mxu0 0.0
    %345 = vmatprep.subr.mxu0 0.0
    %346 = vmatpush1.msra.mxu0 0.0
    %347 = vmatprep.subr.mxu0 0.0
    %348 = vmatpush1.msra.mxu0 0.0
    %349 = vmatprep.subr.mxu0 0.0
    %350 = vmatpush1.msra.mxu0 0.0
    %351 = vmatprep.subr.mxu0 0.0
    %352 = vmatpush1.msra.mxu0 0.0
    %353 = vmatprep.subr.mxu0 0.0
    %354 = vmatpush1.msra.mxu0 0.0
    %355 = vmatprep.mubr.f32.mxu0 0.0
    %356 = vmatmul.mubr.f32.gmra.mrb[0].mxu0 %v289
    %v357 = vpop.f32.mrb[0].mxu0
    %v358 = vadd.f32 %v283, %v357
    %v359 = vpop.f32.mrb[0].mxu0
    %360 = vdwg.mxu0
    %v362 = vlaneseq
    %v363 = vshrl.u32 %v362, 7
    %v364 = vsub.s32 0, %v363
    %v365 = vrot.slane %v213, %v364
    %v367 = vadd.f32 %v358, %v365
    %v368 = vtanh.pop %v367
    %vm369 = vcmask 254976
    %370 = vst.msk [vmem:[#allocation10] sm:$0x3] %vm369, %v368
    // Predicated region
    $region38: #{tpu_custom_call.1} parent=1 // pred_check
      _
    $region39: #{tpu_custom_call.1} parent=1 // pred_check_branch
      %372 = sbr.rel (0) target = $region41
    $region40: #{tpu_custom_call.1} parent=1 // pred_region
      %s374 = ssub.s32 32, 32
      %375 = vsyncadd [#allocation4], %s374
      %s377 = sshll.u32 [#allocation10], 4
      %s378 = int_to_ptr.vmem [resolvable:$true] %s377
      %380 = dma.vmem_to_hbm [thread:$0]  %s378, 32, %s5, [#allocation4]
    $region41: #{tpu_custom_call.1} parent=1 // pred_fallthru
      _
    // Predicated region
    $region42: #{tpu_custom_call.1} parent=1 // pred_check
      _
    $region43: #{tpu_custom_call.1} parent=1 // pred_check_branch
      %382 = sbr.rel (0) target = $region45
    $region44: #{tpu_custom_call.1} parent=1 // pred_region
      %383 = dma.done [#allocation4], 32
    $region45: #{tpu_custom_call.1} parent=1 // pred_fallthru
      _
    %384 = vsyncpa [#allocation3], 1
    %385 = vsyncpa [#allocation6], 1
    %386 = vsyncpa [#allocation9], 1
    %387 = vsyncpa [#allocation4], 1

// kernel: tpu_custom_call.1
$region0: #{tpu_custom_call.1}
  #allocation0 [shape = 'u32[]', space=smem, size = 0x4, offset = 0x4, fixed_abs, tag = 'smem constant byte address 0x4 - core index']
  #allocation1 [shape = 'u32[144,128]{1,0:T(1,128)}', space=vmem, size = 0x12000, scoped, tag = 'internal scratch']
  %s0 = inlined_call_operand.hbm [shape: bf16[2,32], index: 0, kind: input, shape index: {}]
  %s1 = inlined_call_operand.hbm [shape: bf16[2,8,32], index: 1, kind: input, shape index: {}]
  %s2 = inlined_call_operand.hbm [shape: f32[32,32], index: 2, kind: input, shape index: {}]
  %s3 = inlined_call_operand.hbm [shape: f32[32,32], index: 3, kind: input, shape index: {}]
  %s4 = inlined_call_operand.vmem [shape: f32[1,32], index: 4, kind: input, shape index: {}]
  %s5 = inlined_call_operand.hbm [shape: f32[2,32], index: 5, kind: output, shape index: {}]
  %s6 = sld [smem:[#allocation0]]
  $region46: #{tpu_custom_call.1} parent=0
    _
  %s8 = ssub.s32 1, %s6
  %s9 = scalar_select 0, %s8, %s6
  $region1: #{tpu_custom_call.1} parent=0
    #allocation2 [shape = 'u8[512]{0}', space=vmem, size = 0x400, scoped, tag = 'input window, operand 0, single buffered']
    #allocation3 [shape = 's32[1]{0}', space=sflag, size = 0x4, scoped, tag = 'scoped memory for tpu_custom_call.1']
    #allocation4 [shape = 's32[1]{0}', space=sflag, size = 0x4, scoped, tag = 'scoped memory for tpu_custom_call.1']
    #allocation5 [shape = 'u8[4096]{0}', space=vmem, size = 0x1000, scoped, tag = 'input window, operand 1, single buffered']
    #allocation6 [shape = 's32[1]{0}', space=sflag, size = 0x4, scoped, tag = 'scoped memory for tpu_custom_call.1']
    #allocation7 [shape = 'u8[16384]{0}', space=vmem, size = 0x4000, scoped, tag = 'input window, operand 2, single buffered']
    #allocation8 [shape = 'u8[16384]{0}', space=vmem, size = 0x4000, scoped, tag = 'input window, operand 3, single buffered']
    #allocation9 [shape = 's32[1]{0}', space=sflag, size = 0x4, scoped, tag = 'scoped memory for tpu_custom_call.1']
    #allocation10 [shape = 'u8[1024]{0}', space=vmem, size = 0x400, scoped, tag = 'output window, operand 0, single buffered']
    %10 = vsyncpa [#allocation3], 0
    %11 = vsyncpa [#allocation6], 0
    %12 = vsyncpa [#allocation9], 0
    %13 = vsyncpa [#allocation4], 0
    // Predicated region
    $region2: #{tpu_custom_call.1} parent=1 // pred_check
      _
    $region3: #{tpu_custom_call.1} parent=1 // pred_check_branch
      %15 = sbr.rel (0) target = $region5
    $region4: #{tpu_custom_call.1} parent=1 // pred_region
      %s17 = ssub.s32 16, 16
      %18 = vsyncadd [#allocation3], %s17
      %s20 = sshll.u32 [#allocation2], 4
      %s21 = int_to_ptr.vmem [resolvable:$true] %s20
      %23 = dma.hbm_to_vmem [thread:$0]  %s0, 16, %s21, [#allocation3]
    $region5: #{tpu_custom_call.1} parent=1 // pred_fallthru
      _
    // Predicated region
    $region6: #{tpu_custom_call.1} parent=1 // pred_check
      _
    $region7: #{tpu_custom_call.1} parent=1 // pred_check_branch
      %25 = sbr.rel (0) target = $region9
    $region8: #{tpu_custom_call.1} parent=1 // pred_region
      %s27 = ssub.s32 128, 128
      %28 = vsyncadd [#allocation6], %s27
      %s29 = sshll.u32 [#allocation5], 4
      %s30 = int_to_ptr.vmem [resolvable:$true] %s29
      %35 = dma.hbm_to_vmem [thread:$0]  %s1, 128, %s30, [#allocation6], 64, 64, 4
    $region9: #{tpu_custom_call.1} parent=1 // pred_fallthru
      _
    // Predicated region
    $region10: #{tpu_custom_call.1} parent=1 // pred_check
      _
    $region11: #{tpu_custom_call.1} parent=1 // pred_check_branch
      %37 = sbr.rel (0) target = $region13
    $region12: #{tpu_custom_call.1} parent=1 // pred_region
      %s39 = ssub.s32 512, 512
      %40 = vsyncadd [#allocation6], %s39
      %s41 = sshll.u32 [#allocation7], 4
      %s42 = int_to_ptr.vmem [resolvable:$true] %s41
      %47 = dma.hbm_to_vmem [thread:$0]  %s2, 512, %s42, [#allocation6], 128, 128, 8
    $region13: #{tpu_custom_call.1} parent=1 // pred_fallthru
      _
    // Predicated region
    $region14: #{tpu_custom_call.1} parent=1 // pred_check
      _
    $region15: #{tpu_custom_call.1} parent=1 // pred_check_branch
      %49 = sbr.rel (0) target = $region17
    $region16: #{tpu_custom_call.1} parent=1 // pred_region
      %s51 = ssub.s32 512, 512
      %52 = vsyncadd [#allocation9], %s51
      %s53 = sshll.u32 [#allocation8], 4
      %s54 = int_to_ptr.vmem [resolvable:$true] %s53
      %59 = dma.hbm_to_vmem [thread:$0]  %s3, 512, %s54, [#allocation9], 128, 128, 8
    $region17: #{tpu_custom_call.1} parent=1 // pred_fallthru
      _
    // Predicated region
    $region18: #{tpu_custom_call.1} parent=1 // pred_check
      _
    $region19: #{tpu_custom_call.1} parent=1 // pred_check_branch
      %61 = sbr.rel (0) target = $region21
    $region20: #{tpu_custom_call.1} parent=1 // pred_region
      _
    $region21: #{tpu_custom_call.1} parent=1 // pred_fallthru
      _
    // Predicated region
    $region22: #{tpu_custom_call.1} parent=1 // pred_check
      _
    $region23: #{tpu_custom_call.1} parent=1 // pred_check_branch
      %63 = sbr.rel (0) target = $region25
    $region24: #{tpu_custom_call.1} parent=1 // pred_region
      %64 = dma.done [#allocation3], 16
    $region25: #{tpu_custom_call.1} parent=1 // pred_fallthru
      _
    // Predicated region
    $region26: #{tpu_custom_call.1} parent=1 // pred_check
      _
    $region27: #{tpu_custom_call.1} parent=1 // pred_check_branch
      %66 = sbr.rel (0) target = $region29
    $region28: #{tpu_custom_call.1} parent=1 // pred_region
      %67 = dma.done [#allocation6], 128
    $region29: #{tpu_custom_call.1} parent=1 // pred_fallthru
      _
    // Predicated region
    $region30: #{tpu_custom_call.1} parent=1 // pred_check
      _
    $region31: #{tpu_custom_call.1} parent=1 // pred_check_branch
      %69 = sbr.rel (0) target = $region33
    $region32: #{tpu_custom_call.1} parent=1 // pred_region
      %70 = dma.done [#allocation6], 512
    $region33: #{tpu_custom_call.1} parent=1 // pred_fallthru
      _
    // Predicated region
    $region34: #{tpu_custom_call.1} parent=1 // pred_check
      _
    $region35: #{tpu_custom_call.1} parent=1 // pred_check_branch
      %72 = sbr.rel (0) target = $region37
    $region36: #{tpu_custom_call.1} parent=1 // pred_region
      %73 = dma.done [#allocation9], 512
    $region37: #{tpu_custom_call.1} parent=1 // pred_fallthru
      _
    %v74 = vld [vmem:[#allocation2] sm:$0x1]
    %v75 = vunpack.c.l.bf16 %v74
    %v76 = vld [vmem:[#allocation5] sm:$0xf]
    %v77 = vld [vmem:[#allocation5 + $0x4] sm:$0xf]
    %v78 = vunpack.c.l.bf16 %v76
    %v79 = vunpack.c.l.bf16 %v77
    %v82 = vunpack.c.l.s4 1966171168
    %v83 = vunpack.c.0.s8 %v82
    %v84 = vlaneseq
    %v85 = vshrl.u32 %v84, 7
    %v86 = vsub.s32 %v83, %v85
    %v87 = vrot.slane %v75, %v86
    %v88 = vcombine.high %v87, %v87
    %v89 = vlaneseq
    %v90 = vshrl.u32 %v89, 7
    %v91 = vsub.s32 0, %v90
    %v92 = vrot.slane %v87, %v91
    %v93 = vlaneseq
    %v94 = vshrl.u32 %v93, 7
    %v95 = vsub.s32 0, %v94
    %v96 = vrot.slane %v88, %v95
    %v99 = vmul.f32 %v78, %v92
    %v100 = vmul.f32 %v79, %v96
    %vm101 = vcmask 261120
    %v102 = vsel %vm101, %v99, 0.0
    %103 = vadd.xlane.f32.xlu0 %v102
    %v104 = vpop.xlane.xlu0 %103
    %v105 = vsel %vm101, %v100, 0.0
    %106 = vadd.xlane.f32.xlu0 %v105
    %v107 = vpop.xlane.xlu0 %106
    %v110 = vlaneseq
    %v111 = vand.u32 %v110, 127
    %v112 = vlaneseq
    %v113 = vshrl.u32 %v112, 7
    %v114 = vsub.s32 %v111, %v113
    %v115 = vrot.slane %v104, %v114
    %v116 = vlaneseq
    %v117 = vshrl.u32 %v116, 7
    %v118 = vsub.s32 %v111, %v117
    %v119 = vrot.slane %v107, %v118
    %vm120 = vcmask 1041409
    %v121 = vsel %vm120, %v119, %v115
    %vm123 = vcmask 58368
    %v124 = vsel %vm123, %v121, -inf
    %125 = vmax.xlane.f32.xlu0 %v124
    %v126 = vpop.xlane.xlu0 %125
    %v128 = vlaneseq
    %v129 = vshrl.u32 %v128, 7
    %v130 = vsub.s32 0, %v129
    %v131 = vrot.slane %v126, %v130
    %v132 = vlaneseq
    %v133 = vshrl.u32 %v132, 7
    %v134 = vsub.s32 1, %v133
    %v135 = vrot.slane %v126, %v134
    %v138 = vsub.f32 %v104, %v131
    %v139 = vsub.f32 %v107, %v135
    %v140 = vmul.f32 %v138, 1.442695
    %v141 = vpow.pop %v140
    %v142 = vmul.f32 %v139, 1.442695
    %v143 = vpow.pop %v142
    %146 = vset.pattern.permute.xlu0 0
    %147 = vperm.xlu0 %146, %v141
    %v148 = vpop.permute.xlu0 %147
    %149 = vset.pattern.permute.xlu0 0
    %150 = vperm.xlu0 %149, %v143
    %v151 = vpop.permute.xlu0 %150
    %v152 = vlaneseq
    %v153 = vshrl.u32 %v152, 7
    %v154 = vsub.s32 %v111, %v153
    %v155 = vrot.slane %v148, %v154
    %v156 = vlaneseq
    %v157 = vshrl.u32 %v156, 7
    %v158 = vsub.s32 %v111, %v157
    %v159 = vrot.slane %v151, %v158
    %v160 = vsel %vm120, %v159, %v155
    %v162 = vsel %vm123, %v160, 0.0
    %163 = vadd.xlane.f32.xlu0 %v162
    %v164 = vpop.xlane.xlu0 %163
    %v165 = vrcp.pop %v164
    %v167 = vlaneseq
    %v168 = vshrl.u32 %v167, 7
    %v169 = vsub.s32 0, %v168
    %v170 = vrot.slane %v165, %v169
    %v171 = vlaneseq
    %v172 = vshrl.u32 %v171, 7
    %v173 = vsub.s32 1, %v172
    %v174 = vrot.slane %v165, %v173
    %v177 = vmul.f32 %v141, %v170
    %v178 = vmul.f32 %v143, %v174
    %180 = vset.pattern.permute.xlu0 0
    %181 = vperm.xlu0 %180, %v177
    %v182 = vpop.permute.xlu0 %181
    %185 = vset.pattern.permute.xlu0 0
    %186 = vperm.xlu0 %185, %v178
    %v187 = vpop.permute.xlu0 %186
    %v189 = vmul.f32 %v182, %v78
    %v190 = vmul.f32 %v187, %v79
    %v191 = vsel %vm101, %v189, 0.0
    %v192 = vrot.slane %v191, 4
    %v193 = vadd.f32 %v191, %v192
    %v194 = vrot.slane %v193, 2
    %v195 = vadd.f32 %v193, %v194
    %v196 = vrot.slane %v195, 1
    %v197 = vadd.f32 %v195, %v196
    %v198 = vsel %vm101, %v190, 0.0
    %v199 = vrot.slane %v198, 4
    %v200 = vadd.f32 %v198, %v199
    %v201 = vrot.slane %v200, 2
    %v202 = vadd.f32 %v200, %v201
    %v203 = vrot.slane %v202, 1
    %v204 = vadd.f32 %v202, %v203
    %v205 = vld [vmem:[#allocation7] sm:$0xff]
    %v206 = vld [vmem:[#allocation7 + $0x8] sm:$0xff]
    %v207 = vld [vmem:[#allocation7 + $0x10] sm:$0xff]
    %v208 = vld [vmem:[#allocation7 + $0x18] sm:$0xff]
    %v209 = vld [vmem:[#allocation8] sm:$0xff]
    %v210 = vld [vmem:[#allocation8 + $0x8] sm:$0xff]
    %v211 = vld [vmem:[#allocation8 + $0x10] sm:$0xff]
    %v212 = vld [vmem:[#allocation8 + $0x18] sm:$0xff]
    %v213 = vld [vmem:[%s4] sm:$0x1]
    %v214 = vsel %vm101, %v75, 0
    %216 = vmatprep.subr.mxu0 0.0
    %217 = vmatpush1.msra.mxu0 %v209
    %218 = vmatprep.subr.mxu0 0.0
    %219 = vmatpush1.msra.mxu0 %v210
    %220 = vmatprep.subr.mxu0 0.0
    %221 = vmatpush1.msra.mxu0 %v211
    %222 = vmatprep.subr.mxu0 0.0
    %223 = vmatpush1.msra.mxu0 %v212
    %224 = vmatprep.subr.mxu0 0.0
    %225 = vmatpush1.msra.mxu0 0.0
    %226 = vmatprep.subr.mxu0 0.0
    %227 = vmatpush1.msra.mxu0 0.0
    %228 = vmatprep.subr.mxu0 0.0
    %229 = vmatpush1.msra.mxu0 0.0
    %230 = vmatprep.subr.mxu0 0.0
    %231 = vmatpush1.msra.mxu0 0.0
    %232 = vmatprep.subr.mxu0 0.0
    %233 = vmatpush1.msra.mxu0 0.0
    %234 = vmatprep.subr.mxu0 0.0
    %235 = vmatpush1.msra.mxu0 0.0
    %236 = vmatprep.subr.mxu0 0.0
    %237 = vmatpush1.msra.mxu0 0.0
    %238 = vmatprep.subr.mxu0 0.0
    %239 = vmatpush1.msra.mxu0 0.0
    %240 = vmatprep.subr.mxu0 0.0
    %241 = vmatpush1.msra.mxu0 0.0
    %242 = vmatprep.subr.mxu0 0.0
    %243 = vmatpush1.msra.mxu0 0.0
    %244 = vmatprep.subr.mxu0 0.0
    %245 = vmatpush1.msra.mxu0 0.0
    %246 = vmatprep.subr.mxu0 0.0
    %247 = vmatpush1.msra.mxu0 0.0
    %248 = vmatprep.subr.mxu0 0.0
    %249 = vmatpush1.msra.mxu0 0.0
    %250 = vmatprep.subr.mxu0 0.0
    %251 = vmatpush1.msra.mxu0 0.0
    %252 = vmatprep.subr.mxu0 0.0
    %253 = vmatpush1.msra.mxu0 0.0
    %254 = vmatprep.subr.mxu0 0.0
    %255 = vmatpush1.msra.mxu0 0.0
    %256 = vmatprep.subr.mxu0 0.0
    %257 = vmatpush1.msra.mxu0 0.0
    %258 = vmatprep.subr.mxu0 0.0
    %259 = vmatpush1.msra.mxu0 0.0
    %260 = vmatprep.subr.mxu0 0.0
    %261 = vmatpush1.msra.mxu0 0.0
    %262 = vmatprep.subr.mxu0 0.0
    %263 = vmatpush1.msra.mxu0 0.0
    %264 = vmatprep.subr.mxu0 0.0
    %265 = vmatpush1.msra.mxu0 0.0
    %266 = vmatprep.subr.mxu0 0.0
    %267 = vmatpush1.msra.mxu0 0.0
    %268 = vmatprep.subr.mxu0 0.0
    %269 = vmatpush1.msra.mxu0 0.0
    %270 = vmatprep.subr.mxu0 0.0
    %271 = vmatpush1.msra.mxu0 0.0
    %272 = vmatprep.subr.mxu0 0.0
    %273 = vmatpush1.msra.mxu0 0.0
    %274 = vmatprep.subr.mxu0 0.0
    %275 = vmatpush1.msra.mxu0 0.0
    %276 = vmatprep.subr.mxu0 0.0
    %277 = vmatpush1.msra.mxu0 0.0
    %278 = vmatprep.subr.mxu0 0.0
    %279 = vmatpush1.msra.mxu0 0.0
    %280 = vmatprep.mubr.f32.mxu0 0.0
    %281 = vmatmul.mubr.f32.gmra.mrb[0].mxu0 %v214
    %v282 = vpop.f32.mrb[0].mxu0
    %v283 = vadd.f32 0.0, %v282
    %v284 = vpop.f32.mrb[0].mxu0
    %285 = vdwg.mxu0
    %v288 = vsel %vm120, %v204, %v197
    %v289 = vsel %vm101, %v288, 0
    %291 = vmatprep.subr.mxu0 0.0
    %292 = vmatpush1.msra.mxu0 %v205
    %293 = vmatprep.subr.mxu0 0.0
    %294 = vmatpush1.msra.mxu0 %v206
    %295 = vmatprep.subr.mxu0 0.0
    %296 = vmatpush1.msra.mxu0 %v207
    %297 = vmatprep.subr.mxu0 0.0
    %298 = vmatpush1.msra.mxu0 %v208
    %299 = vmatprep.subr.mxu0 0.0
    %300 = vmatpush1.msra.mxu0 0.0
    %301 = vmatprep.subr.mxu0 0.0
    %302 = vmatpush1.msra.mxu0 0.0
    %303 = vmatprep.subr.mxu0 0.0
    %304 = vmatpush1.msra.mxu0 0.0
    %305 = vmatprep.subr.mxu0 0.0
    %306 = vmatpush1.msra.mxu0 0.0
    %307 = vmatprep.subr.mxu0 0.0
    %308 = vmatpush1.msra.mxu0 0.0
    %309 = vmatprep.subr.mxu0 0.0
    %310 = vmatpush1.msra.mxu0 0.0
    %311 = vmatprep.subr.mxu0 0.0
    %312 = vmatpush1.msra.mxu0 0.0
    %313 = vmatprep.subr.mxu0 0.0
    %314 = vmatpush1.msra.mxu0 0.0
    %315 = vmatprep.subr.mxu0 0.0
    %316 = vmatpush1.msra.mxu0 0.0
    %317 = vmatprep.subr.mxu0 0.0
    %318 = vmatpush1.msra.mxu0 0.0
    %319 = vmatprep.subr.mxu0 0.0
    %320 = vmatpush1.msra.mxu0 0.0
    %321 = vmatprep.subr.mxu0 0.0
    %322 = vmatpush1.msra.mxu0 0.0
    %323 = vmatprep.subr.mxu0 0.0
    %324 = vmatpush1.msra.mxu0 0.0
    %325 = vmatprep.subr.mxu0 0.0
    %326 = vmatpush1.msra.mxu0 0.0
    %327 = vmatprep.subr.mxu0 0.0
    %328 = vmatpush1.msra.mxu0 0.0
    %329 = vmatprep.subr.mxu0 0.0
    %330 = vmatpush1.msra.mxu0 0.0
    %331 = vmatprep.subr.mxu0 0.0
    %332 = vmatpush1.msra.mxu0 0.0
    %333 = vmatprep.subr.mxu0 0.0
    %334 = vmatpush1.msra.mxu0 0.0
    %335 = vmatprep.subr.mxu0 0.0
    %336 = vmatpush1.msra.mxu0 0.0
    %337 = vmatprep.subr.mxu0 0.0
    %338 = vmatpush1.msra.mxu0 0.0
    %339 = vmatprep.subr.mxu0 0.0
    %340 = vmatpush1.msra.mxu0 0.0
    %341 = vmatprep.subr.mxu0 0.0
    %342 = vmatpush1.msra.mxu0 0.0
    %343 = vmatprep.subr.mxu0 0.0
    %344 = vmatpush1.msra.mxu0 0.0
    %345 = vmatprep.subr.mxu0 0.0
    %346 = vmatpush1.msra.mxu0 0.0
    %347 = vmatprep.subr.mxu0 0.0
    %348 = vmatpush1.msra.mxu0 0.0
    %349 = vmatprep.subr.mxu0 0.0
    %350 = vmatpush1.msra.mxu0 0.0
    %351 = vmatprep.subr.mxu0 0.0
    %352 = vmatpush1.msra.mxu0 0.0
    %353 = vmatprep.subr.mxu0 0.0
    %354 = vmatpush1.msra.mxu0 0.0
    %355 = vmatprep.mubr.f32.mxu0 0.0
    %356 = vmatmul.mubr.f32.gmra.mrb[0].mxu0 %v289
    %v357 = vpop.f32.mrb[0].mxu0
    %v358 = vadd.f32 %v283, %v357
    %v359 = vpop.f32.mrb[0].mxu0
    %360 = vdwg.mxu0
    %v362 = vlaneseq
    %v363 = vshrl.u32 %v362, 7
    %v364 = vsub.s32 0, %v363
    %v365 = vrot.slane %v213, %v364
    %v367 = vadd.f32 %v358, %v365
    %v368 = vtanh.pop %v367
    %vm369 = vcmask 254976
    %370 = vst.msk [vmem:[#allocation10] sm:$0x3] %vm369, %v368
    // Predicated region
    $region38: #{tpu_custom_call.1} parent=1 // pred_check
      _
    $region39: #{tpu_custom_call.1} parent=1 // pred_check_branch
      %372 = sbr.rel (0) target = $region41
    $region40: #{tpu_custom_call.1} parent=1 // pred_region
      %s374 = ssub.s32 32, 32
      %375 = vsyncadd [#allocation4], %s374
      %s377 = sshll.u32 [#allocation10], 4
      %s378 = int_to_ptr.vmem [resolvable:$true] %s377
      %380 = dma.vmem_to_hbm [thread:$0]  %s378, 32, %s5, [#allocation4]
    $region41: #{tpu_custom_call.1} parent=1 // pred_fallthru
      _
    // Predicated region
    $region42: #{tpu_custom_call.1} parent=1 // pred_check
      _
    $region43: #{tpu_custom_call.1} parent=1 // pred_check_branch
      %382 = sbr.rel (0) target = $region45
    $region44: #{tpu_custom_call.1} parent=1 // pred_region
      %383 = dma.done [#allocation4], 32
    $region45: #{tpu_custom_call.1} parent=1 // pred_fallthru
      _
    %384 = vsyncpa [#allocation3], 1
    %385 = vsyncpa [#allocation6], 1
    %386 = vsyncpa [#allocation9], 1
    %387 = vsyncpa [#allocation4], 1

</llo_original>
